<compile_context>
chip_gen: v5e
topology: v5e:2x2
jax: 0.10.0
libtpu: 0.0.40
codegen_flags: <defaults>
</compile_context>

<pallas_src>
import jax
import jax.numpy as jnp
from jax.experimental import pallas as pl
from jax.experimental.pallas import tpu as pltpu


def _round_up(x, m):
    return (x + m - 1) // m * m


def _make_kernel(tm, steps_per_batch):
    def kernel(tok_ref, w_ref, posb_ref, out_ref):
        # tok_ref : (tm, K_pad)    compute dtype (bf16 default)
        # w_ref   : (K_pad, D_pad) compute dtype, VMEM-resident (constant map)
        # posb_ref: (T_pad, D_pad) f32, VMEM-resident (constant map)
        # out_ref : (tm, D_pad)    output dtype
        acc = jnp.dot(tok_ref[...], w_ref[...],
                      preferred_element_type=jnp.float32)       # MXU, f32 acc
        if steps_per_batch == 1:
            posb = posb_ref[...]
        else:
            i = pl.program_id(0) % steps_per_batch               # scalar core
            row0 = pl.multiple_of(i * tm, tm)                    # aligned start
            posb = posb_ref[pl.ds(row0, tm), :]
        out_ref[...] = (acc + posb).astype(out_ref.dtype)        # one aligned store
    return kernel


def patch_embedding(x_nchw, conv_w, conv_b, cls, pos, patch_size,
                    compute_dtype=jnp.bfloat16, out_dtype=None, block_m=256):
    """x_nchw: [B, C, H, W]; conv_w: [D, C, P, P]; conv_b: [D];
    cls: [1, 1, D]; pos: [1, 1+N, D].  Returns [B, 1+N, D] (eval mode)."""
    B, C, H, W = x_nchw.shape
    P = patch_size
    D = conv_w.shape[0]
    Hp, Wp = H // P, W // P
    N = Hp * Wp
    K = C * P * P
    T = 1 + N                                    # tokens incl. cls
    if out_dtype is None:
        out_dtype = x_nchw.dtype

    # --- tiling: pad token axis UP to the tile; do NOT shrink the tile.
    K_pad = _round_up(K, 128)
    D_pad = _round_up(D, 128)
    tm = min(block_m, _round_up(T, 16))          # mult of 16 (bf16-out dense)
    T_pad = _round_up(T, tm)
    steps_per_batch = T_pad // tm

    # --- glue: NCHW -> patches [B, N, K] (channel-major K, matching the
    #     Conv2d weight flattening [D, C, P, P] -> [D, K]).
    patches = x_nchw.reshape(B, C, Hp, P, Wp, P)
    patches = patches.transpose(0, 2, 4, 1, 3, 5).reshape(B, N, K)

    # Token input: row 0 is a zero "cls patch" (its posb row carries cls+pos),
    # rows 1..N are patches, rows T..T_pad-1 are zero padding.  One pad op.
    tokens_p = jnp.pad(patches.astype(compute_dtype),
                       ((0, 0), (1, T_pad - T), (0, K_pad - K)))
    tokens_2d = tokens_p.reshape(B * T_pad, K_pad)

    # Weight [D, C, P, P] -> [K, D], padded + cast (constant-folds under jit;
    # hoist to param-load time in a real model).
    w_mat = conv_w.reshape(D, K).T.astype(compute_dtype)
    w_p = jnp.pad(w_mat, ((0, K_pad - K), (0, D_pad - D)))

    # posb slab (batch-invariant, VMEM-resident, f32 so the add happens on the
    # f32 accumulator): row 0 = cls + pos[0]; rows 1..N = pos[1:] + conv_b.
    row0 = (cls.reshape(1, D) + pos[0, 0:1, :]).astype(jnp.float32)
    rows = (pos[0, 1:, :] + conv_b[None, :]).astype(jnp.float32)
    posb = jnp.concatenate([row0, rows], axis=0)                 # [T, D]
    posb_p = jnp.pad(posb, ((0, T_pad - T), (0, D_pad - D)))     # [T_pad, D_pad]

    grid = (B * steps_per_batch,)
    out_2d = pl.pallas_call(
        _make_kernel(tm, steps_per_batch),
        out_shape=jax.ShapeDtypeStruct((B * T_pad, D_pad), out_dtype),
        grid=grid,
        in_specs=[
            pl.BlockSpec((tm, K_pad), lambda m: (m, 0)),      # tokens (streamed)
            pl.BlockSpec((K_pad, D_pad), lambda m: (0, 0)),   # W (resident)
            pl.BlockSpec((T_pad, D_pad), lambda m: (0, 0)),   # posb (resident)
        ],
        out_specs=pl.BlockSpec((tm, D_pad), lambda m: (m, 0)),
        # Single flattened parallel axis -> even megacore / dual-TC split.
        compiler_params=pltpu.CompilerParams(
            dimension_semantics=("parallel",)),
    )(tokens_2d, w_p, posb_p)

    out = out_2d.reshape(B, T_pad, D_pad)
    # Slice only if padding was actually introduced (real ViT dims with
    # D % 128 == 0 and T_pad == T skip this pass entirely).
    if T_pad != T or D_pad != D:
        out = out[:, :T, :D]
    return out  # dropout: eval-mode identity


def _reference(x_nchw, conv_w, conv_b, cls, pos, patch_size):
    """Pure-JAX f32 reference matching the PyTorch forward (eval mode)."""
    B = x_nchw.shape[0]
    y = jax.lax.conv_general_dilated(
        x_nchw, conv_w,
        window_strides=(patch_size, patch_size), padding="VALID",
        dimension_numbers=("NCHW", "OIHW", "NCHW"))
    y = y + conv_b.reshape(1, -1, 1, 1)
    Bn, D, Hp, Wp = y.shape
    y = y.transpose(0, 2, 3, 1).reshape(Bn, Hp * Wp, D)     # b (h w) d
    cls_tok = jnp.broadcast_to(cls, (B, 1, D))
    y = jnp.concatenate([cls_tok, y], axis=1)
    y = y + pos
    return y


if __name__ == "__main__":
    # Small ViT patch-embedding config.
    img_size, patch_size, in_channels, em_dim = 16, 4, 4, 32
    B = 2
    num_patches = (img_size // patch_size) ** 2              # 16

    key = jax.random.PRNGKey(0)
    kx, kw, kb, kc, kp = jax.random.split(key, 5)

    x = jax.random.normal(kx, (B, in_channels, img_size, img_size), jnp.float32)
    conv_w = jax.random.normal(kw, (em_dim, in_channels, patch_size, patch_size),
                               jnp.float32) * 0.05
    conv_b = jax.random.normal(kb, (em_dim,), jnp.float32) * 0.05
    cls = jax.random.truncated_normal(kc, -2.0, 2.0, (1, 1, em_dim),
                                      jnp.float32) * 0.02
    pos = jax.random.truncated_normal(kp, -2.0, 2.0, (1, 1 + num_patches, em_dim),
                                      jnp.float32) * 0.02

    ref = _reference(x, conv_w, conv_b, cls, pos, patch_size)

    # f32 compute path: tight check against the f32 reference.
    out_f32 = patch_embedding(x, conv_w, conv_b, cls, pos, patch_size,
                              compute_dtype=jnp.float32)
    out_f32 = jax.block_until_ready(out_f32)
    assert out_f32.shape == (B, 1 + num_patches, em_dim), out_f32.shape
    assert jnp.allclose(out_f32, ref, atol=1e-4, rtol=1e-4), \
        float(jnp.max(jnp.abs(out_f32 - ref)))

    # bf16 compute path (default, the fast path on v6e/v7x): bf16 operands with
    # f32 accumulation -> compare at a bf16-appropriate tolerance.
    out_bf16 = patch_embedding(x, conv_w, conv_b, cls, pos, patch_size)
    out_bf16 = jax.block_until_ready(out_bf16)
    assert out_bf16.shape == (B, 1 + num_patches, em_dim), out_bf16.shape
    assert jnp.allclose(out_bf16, ref, atol=2e-2, rtol=2e-2), \
        float(jnp.max(jnp.abs(out_bf16 - ref)))

    print("KERNEL_OK")
</pallas_src>

<mosaic_0001>
module attributes {stable_mosaic.version = 11 : i64} {
  func.func @kernel(%arg0: i32, %arg1: memref<32x128xf32, #tpu.memory_space<vmem>>, %arg2: memref<128x128xf32, #tpu.memory_space<vmem>>, %arg3: memref<32x128xf32, #tpu.memory_space<vmem>>, %arg4: memref<32x128xf32, #tpu.memory_space<vmem>>) attributes {dimension_semantics = [#tpu.dimension_semantics<parallel>], iteration_bounds = array<i64: 2>, scalar_prefetch = 0 : i64, scratch_operands = 0 : i64, tpu.core_type = #tpu.core_type<tc>, window_params = [{transform_indices = @transform_0, window_bounds = array<i64: 32, 128>}, {pipeline_mode = #tpu.pipeline_mode<synchronous>, transform_indices = @transform_1, window_bounds = array<i64: 128, 128>}, {pipeline_mode = #tpu.pipeline_mode<synchronous>, transform_indices = @transform_2, window_bounds = array<i64: 32, 128>}, {transform_indices = @transform_3, window_bounds = array<i64: 32, 128>}]} {
    %c0 = arith.constant 0 : index
    %c0_0 = arith.constant 0 : index
    %0 = vector.load %arg1[%c0, %c0_0] : memref<32x128xf32, #tpu.memory_space<vmem>>, vector<32x128xf32>
    %c0_1 = arith.constant 0 : index
    %c0_2 = arith.constant 0 : index
    %1 = vector.load %arg2[%c0_1, %c0_2] : memref<128x128xf32, #tpu.memory_space<vmem>>, vector<128x128xf32>
    %cst = arith.constant dense<0.000000e+00> : vector<32x128xf32>
    %2 = tpu.matmul %0, %1, %cst {dimension_numbers = #tpu.dot_dimension_numbers<[1], [0], [0], [1], [0, 0, 1, 1], [], []>} : vector<32x128xf32>, vector<128x128xf32>, vector<32x128xf32> -> vector<32x128xf32>
    %c0_3 = arith.constant 0 : index
    %c0_4 = arith.constant 0 : index
    %3 = vector.load %arg3[%c0_3, %c0_4] : memref<32x128xf32, #tpu.memory_space<vmem>>, vector<32x128xf32>
    %4 = arith.addf %2, %3 : vector<32x128xf32>
    %c0_5 = arith.constant 0 : index
    %c0_6 = arith.constant 0 : index
    %5 = vector.load %arg4[%c0_5, %c0_6] : memref<32x128xf32, #tpu.memory_space<vmem>>, vector<32x128xf32>
    tpu.vector_store %arg4[%c0_5, %c0_6], %4 {strides = array<i32>} : memref<32x128xf32, #tpu.memory_space<vmem>>, vector<32x128xf32>,
    return
  }
  func.func @transform_0(%arg0: i32) -> (i32, i32) {
    %c0_i32 = arith.constant 0 : i32
    %c0_i32_0 = arith.constant 0 : i32
    return %arg0, %c0_i32 : i32, i32
  }
  func.func @transform_1(%arg0: i32) -> (i32, i32) {
    %c0_i32 = arith.constant 0 : i32
    %c0_i32_0 = arith.constant 0 : i32
    %c0_i32_1 = arith.constant 0 : i32
    return %c0_i32, %c0_i32_0 : i32, i32
  }
  func.func @transform_2(%arg0: i32) -> (i32, i32) {
    %c0_i32 = arith.constant 0 : i32
    %c0_i32_0 = arith.constant 0 : i32
    %c0_i32_1 = arith.constant 0 : i32
    return %c0_i32, %c0_i32_0 : i32, i32
  }
  func.func @transform_3(%arg0: i32) -> (i32, i32) {
    %c0_i32 = arith.constant 0 : i32
    %c0_i32_0 = arith.constant 0 : i32
    return %arg0, %c0_i32 : i32, i32
  }
}

</mosaic_0001>

<llo_original>
// kernel: tpu_custom_call.1
$region0: #{tpu_custom_call.1}
  #allocation0 [shape = 'u32[]', space=smem, size = 0x4, offset = 0x4, fixed_abs, tag = 'smem constant byte address 0x4 - core index']
  #allocation1 [shape = 'u32[72,128]{1,0:T(1,128)}', space=vmem, size = 0x9000, scoped, tag = 'internal scratch']
  %s0 = inlined_call_operand.hbm [shape: f32[64,128], index: 0, kind: input, shape index: {}]
  %s1 = inlined_call_operand.hbm [shape: f32[128,128], index: 1, kind: input, shape index: {}]
  %s2 = inlined_call_operand.hbm [shape: f32[32,128], index: 2, kind: input, shape index: {}]
  %s3 = inlined_call_operand.hbm [shape: f32[64,128], index: 3, kind: output, shape index: {}]
  %s4 = sld [smem:[#allocation0]]
  $region57: #{tpu_custom_call.1} parent=0
    _
  %s6 = ssub.s32 1, %s4
  %s7 = scalar_select 0, %s6, %s4
  $region1: #{tpu_custom_call.1} parent=0
    #allocation2 [shape = 'u8[32768]{0}', space=vmem, size = 0x8000, scoped, tag = 'input window, operand 0']
    #allocation3 [shape = 's32[2]{0}', space=sflag, size = 0x8, scoped, tag = 'scoped memory for tpu_custom_call.1']
    #allocation4 [shape = 's32[2]{0}', space=sflag, size = 0x8, scoped, tag = 'scoped memory for tpu_custom_call.1']
    #allocation5 [shape = 'u8[65536]{0}', space=vmem, size = 0x10000, scoped, tag = 'input window, operand 1, single buffered']
    #allocation6 [shape = 's32[1]{0}', space=sflag, size = 0x4, scoped, tag = 'scoped memory for tpu_custom_call.1']
    #allocation7 [shape = 'u8[16384]{0}', space=vmem, size = 0x4000, scoped, tag = 'input window, operand 2, single buffered']
    #allocation8 [shape = 'u8[32768]{0}', space=vmem, size = 0x8000, scoped, tag = 'output window, operand 0']
    %8 = vsyncpa [#allocation3], 0
    %s9 = scalar_lea.sflag [#allocation3], 1
    %10 = vsyncpa %s9, 0
    %11 = vsyncpa [#allocation6], 0
    %12 = vsyncpa [#allocation4], 0
    %s13 = scalar_lea.sflag [#allocation4], 1
    %14 = vsyncpa %s13, 0
    loop: start=0, step=1, limit=4
    $region2: #{tpu_custom_call.1} parent=1 // loop_pre_header
      _
    $region3: #{tpu_custom_call.1} parent=1 // loop_header
      %s16 = sphi 0, %s20
      %p17 = scmp.ge.s32.totalorder %s16, 4
      %s26 = sphi 0, %s28
      %s29 = sphi 0, %s26
      %s30 = sphi 0, %s29
      %s46 = sphi 0, %s30
      %s50 = sphi 0, %s50
      %s52 = sphi 0, %s50
      %s53 = sphi 0, %s52
      %s67 = sphi 0, %s53
      %s71 = sphi 0, %s71
      %s73 = sphi 0, %s71
      %s74 = sphi 0, %s73
      %s88 = sphi 0, %s74
      %s94 = sphi 0, %s96
      %s97 = sphi 0, %s94
      %s98 = sphi 0, %s97
      %s114 = sphi 0, %s98
    $region4: #{tpu_custom_call.1} parent=1 // loop_header_branch
      %19 = sbr.rel (%p17) target = $region8
    $region5: #{tpu_custom_call.1} parent=1 // loop_body
      %s21 = ssub.s32 %s16, 1
      %s22 = ssub.s32 %s16, 2
      %s23 = sadd.s32 %s16, 1
      %s24 = ssub.s32 %s16, %s23
      %p25 = scmp.eq.s32.totalorder %s24, 0
      %s27 = sadd.s32 %s26, 1
      %s28 = scalar_select %p25, %s26, %s27
      %p31 = pneg %p25
      %p32 = scmp.eq.s32.totalorder %s16, 1
      %p33 = por %p31, %p32
      %p34 = scmp.ne.s32.totalorder %s26, %s29
      %p35 = scmp.eq.s32.totalorder %s16, 0
      %p36 = por %p34, %p35
      %p37 = scmp.ne.s32.totalorder %s26, %s29
      %p38 = scmp.eq.s32.totalorder %s21, 1
      %p39 = por %p37, %p38
      %p40 = scmp.ne.s32.totalorder %s29, %s30
      %p41 = scmp.eq.s32.totalorder %s21, 0
      %p42 = por %p40, %p41
      %p43 = scmp.ne.s32.totalorder %s29, %s30
      %p44 = scmp.eq.s32.totalorder %s22, 1
      %p45 = por %p43, %p44
      %p47 = scmp.ne.s32.totalorder %s30, %s46
      %p48 = scmp.eq.s32.totalorder %s22, 0
      %p49 = por %p47, %p48
      %s51 = sadd.s32 %s50, 1
      %p54 = scmp.eq.s32.totalorder %s16, 1
      %p55 = scmp.ne.s32.totalorder %s50, %s52
      %p56 = scmp.eq.s32.totalorder %s16, 0
      %p57 = por %p55, %p56
      %p58 = scmp.ne.s32.totalorder %s50, %s52
      %p59 = scmp.eq.s32.totalorder %s21, 1
      %p60 = por %p58, %p59
      %p61 = scmp.ne.s32.totalorder %s52, %s53
      %p62 = scmp.eq.s32.totalorder %s21, 0
      %p63 = por %p61, %p62
      %p64 = scmp.ne.s32.totalorder %s52, %s53
      %p65 = scmp.eq.s32.totalorder %s22, 1
      %p66 = por %p64, %p65
      %p68 = scmp.ne.s32.totalorder %s53, %s67
      %p69 = scmp.eq.s32.totalorder %s22, 0
      %p70 = por %p68, %p69
      %s72 = sadd.s32 %s71, 1
      %p75 = scmp.eq.s32.totalorder %s16, 1
      %p76 = scmp.ne.s32.totalorder %s71, %s73
      %p77 = scmp.eq.s32.totalorder %s16, 0
      %p78 = por %p76, %p77
      %p79 = scmp.ne.s32.totalorder %s71, %s73
      %p80 = scmp.eq.s32.totalorder %s21, 1
      %p81 = por %p79, %p80
      %p82 = scmp.ne.s32.totalorder %s73, %s74
      %p83 = scmp.eq.s32.totalorder %s21, 0
      %p84 = por %p82, %p83
      %p85 = scmp.ne.s32.totalorder %s73, %s74
      %p86 = scmp.eq.s32.totalorder %s22, 1
      %p87 = por %p85, %p86
      %p89 = scmp.ne.s32.totalorder %s74, %s88
      %p90 = scmp.eq.s32.totalorder %s22, 0
      %p91 = por %p89, %p90
      %s92 = ssub.s32 %s16, %s23
      %p93 = scmp.eq.s32.totalorder %s92, 0
      %s95 = sadd.s32 %s94, 1
      %s96 = scalar_select %p93, %s94, %s95
      %p99 = pneg %p93
      %p100 = scmp.eq.s32.totalorder %s16, 1
      %p101 = por %p99, %p100
      %p102 = scmp.ne.s32.totalorder %s94, %s97
      %p103 = scmp.eq.s32.totalorder %s16, 0
      %p104 = por %p102, %p103
      %p105 = scmp.ne.s32.totalorder %s94, %s97
      %p106 = scmp.eq.s32.totalorder %s21, 1
      %p107 = por %p105, %p106
      %p108 = scmp.ne.s32.totalorder %s97, %s98
      %p109 = scmp.eq.s32.totalorder %s21, 0
      %p110 = por %p108, %p109
      %p111 = scmp.ne.s32.totalorder %s97, %s98
      %p112 = scmp.eq.s32.totalorder %s22, 1
      %p113 = por %p111, %p112
      %p115 = scmp.ne.s32.totalorder %s98, %s114
      %p116 = scmp.eq.s32.totalorder %s22, 0
      %p117 = por %p115, %p116
      %p118 = scmp.le.s32.totalorder 1, %s16
      %p119 = scmp.lt.s32.totalorder %s16, 3
      %p120 = pnand %p118, %p119
      %p121 = pneg %p120
      // Predicated region
      $region9: #{tpu_custom_call.1} parent=5 // pred_check
        _
      $region10: #{tpu_custom_call.1} parent=5 // pred_check_branch
        %123 = sbr.rel (%p120) target = $region12
      $region11: #{tpu_custom_call.1} parent=5 // pred_region
        %s124 = ssub.s32 %s16, 1
        // Predicated region
        $region13: #{tpu_custom_call.1} parent=11 // pred_check
          %p125 = pneg %p63
        $region14: #{tpu_custom_call.1} parent=11 // pred_check_branch
          %127 = sbr.rel (%p125) target = $region16
        $region15: #{tpu_custom_call.1} parent=11 // pred_region
          %129 = vsyncadd [#allocation6], 0
          %s130 = sshll.u32 %s1, 4
          %s131 = int_to_ptr.hbm [resolvable:$true] %s130
          %s132 = sshll.u32 [#allocation5], 4
          %s133 = int_to_ptr.vmem [resolvable:$true] %s132
          %138 = dma.hbm_to_vmem [thread:$0]  %s131, 2048, %s133, [#allocation6], 128, 128, 8
        $region16: #{tpu_custom_call.1} parent=11 // pred_fallthru
          _
        // Predicated region
        $region17: #{tpu_custom_call.1} parent=11 // pred_check
          %p139 = pneg %p84
        $region18: #{tpu_custom_call.1} parent=11 // pred_check_branch
          %141 = sbr.rel (%p139) target = $region20
        $region19: #{tpu_custom_call.1} parent=11 // pred_region
          %143 = vsyncadd [#allocation6], 0
          %s144 = sshll.u32 %s2, 4
          %s145 = int_to_ptr.hbm [resolvable:$true] %s144
          %s146 = sshll.u32 [#allocation7], 4
          %s147 = int_to_ptr.vmem [resolvable:$true] %s146
          %152 = dma.hbm_to_vmem [thread:$0]  %s145, 512, %s147, [#allocation6], 128, 128, 8
        $region20: #{tpu_custom_call.1} parent=11 // pred_fallthru
          _
      $region12: #{tpu_custom_call.1} parent=5 // pred_fallthru
        _
      %p153 = scmp.lt.s32.totalorder %s16, 2
      // Predicated region
      $region21: #{tpu_custom_call.1} parent=5 // pred_check
        %p154 = pneg %p153
      $region22: #{tpu_custom_call.1} parent=5 // pred_check_branch
        %156 = sbr.rel (%p154) target = $region24
      $region23: #{tpu_custom_call.1} parent=5 // pred_region
        // Predicated region
        $region25: #{tpu_custom_call.1} parent=23 // pred_check
          %p157 = pneg %p36
        $region26: #{tpu_custom_call.1} parent=23 // pred_check_branch
          %159 = sbr.rel (%p157) target = $region28
        $region27: #{tpu_custom_call.1} parent=23 // pred_region
          %s160 = sand.u32 %s26, 1
          %s161 = scalar_lea.sflag [#allocation3], %s160
          %s162 = sand.u32 %s26, 1
          %s163 = smul.addr %s162, 32
          %s164 = scalar_lea.vmem [#allocation2], %s163
          %s165 = smul.u32 4, %s16
          %167 = vsyncadd %s161, 0
          %s168 = smul.addr %s165, 8
          %s169 = scalar_lea.hbm %s0, %s168
          %s170 = sshll.u32 %s169, 4
          %s171 = int_to_ptr.hbm [resolvable:$true] %s170
          %s172 = sshll.u32 %s164, 4
          %s173 = int_to_ptr.vmem [resolvable:$true] %s172
          %178 = dma.hbm_to_vmem [thread:$0]  %s171, 512, %s173, %s161, 128, 128, 8
        $region28: #{tpu_custom_call.1} parent=23 // pred_fallthru
          _
      $region24: #{tpu_custom_call.1} parent=5 // pred_fallthru
        _
      %p179 = scmp.le.s32.totalorder 1, %s16
      %p180 = scmp.lt.s32.totalorder %s16, 3
      %p181 = pnand %p179, %p180
      %p182 = pneg %p181
      // Predicated region
      $region29: #{tpu_custom_call.1} parent=5 // pred_check
        _
      $region30: #{tpu_custom_call.1} parent=5 // pred_check_branch
        %184 = sbr.rel (%p181) target = $region32
      $region31: #{tpu_custom_call.1} parent=5 // pred_region
        %s185 = ssub.s32 %s16, 1
        %s186 = sand.u32 %s29, 1
        %s187 = scalar_lea.sflag [#allocation3], %s186
        %s188 = sand.u32 %s29, 1
        %s189 = smul.addr %s188, 32
        %s190 = scalar_lea.vmem [#allocation2], %s189
        // Predicated region
        $region33: #{tpu_custom_call.1} parent=31 // pred_check
          %p191 = pneg %p42
        $region34: #{tpu_custom_call.1} parent=31 // pred_check_branch
          %193 = sbr.rel (%p191) target = $region36
        $region35: #{tpu_custom_call.1} parent=31 // pred_region
          %195 = dma.done %s187, 512
        $region36: #{tpu_custom_call.1} parent=31 // pred_fallthru
          _
        // Predicated region
        $region37: #{tpu_custom_call.1} parent=31 // pred_check
          %p196 = pneg %p63
        $region38: #{tpu_custom_call.1} parent=31 // pred_check_branch
          %198 = sbr.rel (%p196) target = $region40
        $region39: #{tpu_custom_call.1} parent=31 // pred_region
          %200 = dma.done [#allocation6], 2048
        $region40: #{tpu_custom_call.1} parent=31 // pred_fallthru
          _
        // Predicated region
        $region41: #{tpu_custom_call.1} parent=31 // pred_check
          %p201 = pneg %p84
        $region42: #{tpu_custom_call.1} parent=31 // pred_check_branch
          %203 = sbr.rel (%p201) target = $region44
        $region43: #{tpu_custom_call.1} parent=31 // pred_region
          %205 = dma.done [#allocation6], 512
        $region44: #{tpu_custom_call.1} parent=31 // pred_fallthru
          _
        %s206 = sand.u32 %s29, 1
        %s207 = scalar_lea.sflag [#allocation3], %s206
        %s208 = sand.u32 %s29, 1
        %s209 = smul.addr %s208, 32
        %s210 = scalar_lea.vmem [#allocation2], %s209
        %p211 = pneg %p42
        %p212 = pneg %p39
        %p213 = pneg %p63
        %p214 = pneg %p60
        %p215 = pneg %p84
        %p216 = pneg %p81
        %p217 = pneg %p110
        %p218 = pneg %p107
        %s219 = sand.u32 %s97, 1
        %s220 = scalar_lea.sflag [#allocation4], %s219
        %s221 = sand.u32 %s97, 1
        %s222 = smul.addr %s221, 32
        %s223 = scalar_lea.vmem [#allocation8], %s222
        %s224 = smul.u32 4, %s21
        %s225 = smul.u32 4, %s21
        %v226 = vld [vmem:[%s190] sm:$0xff]
        %v227 = vld [vmem:[%s190 + $0x8] sm:$0xff]
        %v228 = vld [vmem:[%s190 + $0x10] sm:$0xff]
        %v229 = vld [vmem:[%s190 + $0x18] sm:$0xff]
        %v230 = vld [vmem:[#allocation5] sm:$0xff]
        %v231 = vld [vmem:[#allocation5 + $0x8] sm:$0xff]
        %v232 = vld [vmem:[#allocation5 + $0x10] sm:$0xff]
        %v233 = vld [vmem:[#allocation5 + $0x18] sm:$0xff]
        %v234 = vld [vmem:[#allocation5 + $0x20] sm:$0xff]
        %v235 = vld [vmem:[#allocation5 + $0x28] sm:$0xff]
        %v236 = vld [vmem:[#allocation5 + $0x30] sm:$0xff]
        %v237 = vld [vmem:[#allocation5 + $0x38] sm:$0xff]
        %v238 = vld [vmem:[#allocation5 + $0x40] sm:$0xff]
        %v239 = vld [vmem:[#allocation5 + $0x48] sm:$0xff]
        %v240 = vld [vmem:[#allocation5 + $0x50] sm:$0xff]
        %v241 = vld [vmem:[#allocation5 + $0x58] sm:$0xff]
        %v242 = vld [vmem:[#allocation5 + $0x60] sm:$0xff]
        %v243 = vld [vmem:[#allocation5 + $0x68] sm:$0xff]
        %v244 = vld [vmem:[#allocation5 + $0x70] sm:$0xff]
        %v245 = vld [vmem:[#allocation5 + $0x78] sm:$0xff]
        %v246 = vld [vmem:[#allocation7] sm:$0xff]
        %v247 = vld [vmem:[#allocation7 + $0x8] sm:$0xff]
        %v248 = vld [vmem:[#allocation7 + $0x10] sm:$0xff]
        %v249 = vld [vmem:[#allocation7 + $0x18] sm:$0xff]
        %250 = vmatpush.msra.mxu0 %v245
        %251 = vmatpush.msra.mxu0 %v244
        %252 = vmatpush.msra.mxu0 %v243
        %253 = vmatpush.msra.mxu0 %v242
        %254 = vmatpush.msra.mxu0 %v241
        %255 = vmatpush.msra.mxu0 %v240
        %256 = vmatpush.msra.mxu0 %v239
        %257 = vmatpush.msra.mxu0 %v238
        %258 = vmatpush.msra.mxu0 %v237
        %259 = vmatpush.msra.mxu0 %v236
        %260 = vmatpush.msra.mxu0 %v235
        %261 = vmatpush.msra.mxu0 %v234
        %262 = vmatpush.msra.mxu0 %v233
        %263 = vmatpush.msra.mxu0 %v232
        %264 = vmatpush.msra.mxu0 %v231
        %265 = vmatpush.msra.mxu0 %v230
        %266 = vmatmul.f32.gmra.mxu0 %v226
        %v267 = vpop.f32.mrf.mxu0
        %v268 = vadd.f32 %v246, %v267
        %269 = vmatmul.f32.gmra.mxu0 %v227
        %v270 = vpop.f32.mrf.mxu0
        %v271 = vadd.f32 %v247, %v270
        %272 = vmatmul.f32.gmra.mxu0 %v228
        %v273 = vpop.f32.mrf.mxu0
        %v274 = vadd.f32 %v248, %v273
        %275 = vmatmul.f32.gmra.mxu0 %v229
        %v276 = vpop.f32.mrf.mxu0
        %v277 = vadd.f32 %v249, %v276
        %278 = vdwg.mxu0
        %279 = vst [vmem:[%s223] sm:$0xff] %v268
        %280 = vst [vmem:[%s223 + $0x8] sm:$0xff] %v271
        %281 = vst [vmem:[%s223 + $0x10] sm:$0xff] %v274
        %282 = vst [vmem:[%s223 + $0x18] sm:$0xff] %v277
        %s283 = sand.u32 %s97, 1
        %s284 = scalar_lea.sflag [#allocation4], %s283
        %s285 = sand.u32 %s97, 1
        %s286 = smul.addr %s285, 32
        %s287 = scalar_lea.vmem [#allocation8], %s286
        // Predicated region
        $region45: #{tpu_custom_call.1} parent=31 // pred_check
          %p288 = pneg %p107
        $region46: #{tpu_custom_call.1} parent=31 // pred_check_branch
          %290 = sbr.rel (%p288) target = $region48
        $region47: #{tpu_custom_call.1} parent=31 // pred_region
          %s291 = smul.u32 4, %s21
          %293 = vsyncadd %s284, 0
          %s294 = smul.addr %s291, 8
          %s295 = scalar_lea.hbm %s3, %s294
          %s296 = sshll.u32 %s287, 4
          %s297 = int_to_ptr.vmem [resolvable:$true] %s296
          %s298 = sshll.u32 %s295, 4
          %s299 = int_to_ptr.hbm [resolvable:$true] %s298
          %304 = dma.vmem_to_hbm [thread:$0]  %s297, 512, %s299, %s284, 128, 128, 8
        $region48: #{tpu_custom_call.1} parent=31 // pred_fallthru
          _
      $region32: #{tpu_custom_call.1} parent=5 // pred_fallthru
        _
      %p305 = scmp.le.s32.totalorder 2, %s16
      // Predicated region
      $region49: #{tpu_custom_call.1} parent=5 // pred_check
        %p306 = pneg %p305
      $region50: #{tpu_custom_call.1} parent=5 // pred_check_branch
        %308 = sbr.rel (%p306) target = $region52
      $region51: #{tpu_custom_call.1} parent=5 // pred_region
        %s309 = ssub.s32 %s16, 2
        // Predicated region
        $region53: #{tpu_custom_call.1} parent=51 // pred_check
          %p310 = pneg %p113
        $region54: #{tpu_custom_call.1} parent=51 // pred_check_branch
          %312 = sbr.rel (%p310) target = $region56
        $region55: #{tpu_custom_call.1} parent=51 // pred_region
          %s313 = sand.u32 %s98, 1
          %s314 = scalar_lea.sflag [#allocation4], %s313
          %s315 = sand.u32 %s98, 1
          %s316 = smul.addr %s315, 32
          %s317 = scalar_lea.vmem [#allocation8], %s316
          %319 = dma.done %s314, 512
        $region56: #{tpu_custom_call.1} parent=51 // pred_fallthru
          _
      $region52: #{tpu_custom_call.1} parent=5 // pred_fallthru
        _
    $region6: #{tpu_custom_call.1} parent=1 // loop_footer
      %s20 = sadd.s32 1, %s16
    $region7: #{tpu_custom_call.1} parent=1 // loop_footer_branch
      %15 = sbr.rel target = $region3
    $region8: #{tpu_custom_call.1} parent=1 // loop_exit
      _
    %320 = vsyncpa [#allocation3], 1
    %s321 = scalar_lea.sflag [#allocation3], 1
    %322 = vsyncpa %s321, 1
    %323 = vsyncpa [#allocation6], 1
    %324 = vsyncpa [#allocation4], 1
    %s325 = scalar_lea.sflag [#allocation4], 1
    %326 = vsyncpa %s325, 1

</llo_original>
